<compile_context>
chip_gen: v5e
topology: v5e:2x2
jax: 0.10.0
libtpu: 0.0.40
codegen_flags: <defaults>
</compile_context>

<pallas_src>
import jax
import jax.numpy as jnp
from jax.experimental import pallas as pl
from jax.experimental.pallas import tpu as pltpu

OUT_DIM = 64                        # fixed by the module: nn.Linear(input_dim, 64)
_TILE_BUDGET_BYTES = 16 * 1024 * 1024   # double-buffered streaming working set
_VMEM_LIMIT_BYTES = 32 * 1024 * 1024    # scoped VMEM limit (safe on v5e/v6e/v7x)
_MEGACORE_SPLIT_ROWS = 4096             # split batch across >=2 grid steps past this


def _batch_tile(B, D, out_width, obs_bytes=4, out_bytes=4):
    """Rows per grid step, sized from a VMEM byte budget (double-buffered obs +
    output streams).  Resident weight/bias are small and covered by the headroom
    between the tile budget and vmem_limit_bytes."""
    per_row = 2 * (D * obs_bytes + out_width * out_bytes)   # 2 = double buffering
    tb = max(8, (_TILE_BUDGET_BYTES // per_row) // 8 * 8)
    if B <= tb:
        if B >= _MEGACORE_SPLIT_ROWS:
            # Large batch that fits in one tile: split into 2 grid steps so the
            # "parallel" axis can shard across both v7x TensorCores.
            half = -(-B // 2)
            return min(tb, -(-half // 8) * 8)
        return B        # full-array block (always a legal block shape)
    return tb


# ---------------------------------------------------------------------------
# forward(): prediction_NN(obs)
# ---------------------------------------------------------------------------
def linear_kernel(obs_ref, w_ref, b_ref, out_ref):
    # In-kernel bf16 cast of the f32 obs tile (saves the wrapper-side cast's HBM
    # round trip); bf16 x bf16 MXU matmul with f32 accumulation; f32 bias add.
    x = obs_ref[...].astype(jnp.bfloat16)
    acc = jnp.dot(x, w_ref[...], preferred_element_type=jnp.float32)
    out_ref[...] = (acc + b_ref[...]).astype(out_ref.dtype)


def prepare_params(weight, bias):
    """One-time parameter prep, hoisted out of the per-call hot path.

    weight: (64, D) float32  -- PyTorch layout (out_features, in_features)
    bias:   (64,)   float32
    returns (w_t, b2d) with w_t: (D, 64) bfloat16, b2d: (1, 64) float32
    """
    w_t = jnp.asarray(weight, jnp.float32).T.astype(jnp.bfloat16)   # (D, 64)
    b2d = jnp.asarray(bias, jnp.float32).reshape(1, OUT_DIM)        # (1, 64)
    return w_t, b2d


@jax.jit
def rnd_forward(obs, w_t, b2d):
    """Pallas implementation of RND_model.forward (prediction_NN linear).

    obs: (B, D) float32 (cast to bf16 inside the kernel; accumulation is f32)
    w_t: (D, 64) bfloat16, b2d: (1, 64) float32 (from prepare_params)
    returns (B, 64) float32
    """
    B, D = obs.shape
    tb = _batch_tile(B, D, OUT_DIM)
    grid = (pl.cdiv(B, tb),)

    cost = pl.CostEstimate(
        flops=2 * B * D * OUT_DIM,
        transcendentals=0,
        bytes_accessed=4 * B * D + 2 * D * OUT_DIM + 4 * OUT_DIM + 4 * B * OUT_DIM,
    )

    # TODO(synk): if this linear stays standalone and store-path utilisation
    # matters, consider padding W/bias to 128 output lanes (lane-dense vst) or a
    # bf16 output; skipped here because the fused reward kernel below removes
    # the (B, 64) writeback entirely in the real RND loss path.
    return pl.pallas_call(
        linear_kernel,
        out_shape=jax.ShapeDtypeStruct((B, OUT_DIM), jnp.float32),
        grid_spec=pltpu.PrefetchScalarGridSpec(
            num_scalar_prefetch=0,
            grid=grid,
            in_specs=[
                pl.BlockSpec((tb, D), lambda i: (i, 0)),        # obs streams over B
                pl.BlockSpec((D, OUT_DIM), lambda i: (0, 0)),   # weight resident
                pl.BlockSpec((1, OUT_DIM), lambda i: (0, 0)),   # bias resident
            ],
            out_specs=pl.BlockSpec((tb, OUT_DIM), lambda i: (i, 0)),
        ),
        compiler_params=pltpu.CompilerParams(
            dimension_semantics=("parallel",),          # batch axis, megacore-shardable
            vmem_limit_bytes=_VMEM_LIMIT_BYTES,
        ),
        cost_estimate=cost,
    )(obs, w_t, b2d)


# ---------------------------------------------------------------------------
# Fused RND intrinsic reward: ||prediction_NN(obs) - fixed_NN(obs)||^2 per row.
# Single pallas_call: both linears + squared-error reduction, (B, 1) f32 output.
# ---------------------------------------------------------------------------
def rnd_fused_kernel(obs_ref, wp_ref, bp_ref, wf_ref, bf_ref, out_ref):
    x = obs_ref[...].astype(jnp.bfloat16)
    pred = jnp.dot(x, wp_ref[...], preferred_element_type=jnp.float32) + bp_ref[...]
    fixd = jnp.dot(x, wf_ref[...], preferred_element_type=jnp.float32) + bf_ref[...]
    d = pred - fixd
    out_ref[...] = jnp.sum(d * d, axis=-1, keepdims=True)


@jax.jit
def rnd_intrinsic_reward(obs, wp_t, bp2d, wf_t, bf2d):
    """Per-row squared RND error, fused into one kernel.

    obs: (B, D) float32; (wp_t, bp2d) / (wf_t, bf2d) from prepare_params for the
    prediction / fixed networks.  returns (B, 1) float32.
    """
    B, D = obs.shape
    tb = _batch_tile(B, D, 1)
    grid = (pl.cdiv(B, tb),)

    cost = pl.CostEstimate(
        flops=4 * B * D * OUT_DIM + 4 * B * OUT_DIM,
        transcendentals=0,
        bytes_accessed=4 * B * D + 2 * (2 * D * OUT_DIM) + 2 * (4 * OUT_DIM) + 4 * B,
    )

    return pl.pallas_call(
        rnd_fused_kernel,
        out_shape=jax.ShapeDtypeStruct((B, 1), jnp.float32),
        grid_spec=pltpu.PrefetchScalarGridSpec(
            num_scalar_prefetch=0,
            grid=grid,
            in_specs=[
                pl.BlockSpec((tb, D), lambda i: (i, 0)),        # obs streams over B
                pl.BlockSpec((D, OUT_DIM), lambda i: (0, 0)),   # prediction weight
                pl.BlockSpec((1, OUT_DIM), lambda i: (0, 0)),   # prediction bias
                pl.BlockSpec((D, OUT_DIM), lambda i: (0, 0)),   # fixed weight
                pl.BlockSpec((1, OUT_DIM), lambda i: (0, 0)),   # fixed bias
            ],
            out_specs=pl.BlockSpec((tb, 1), lambda i: (i, 0)),
        ),
        compiler_params=pltpu.CompilerParams(
            dimension_semantics=("parallel",),
            vmem_limit_bytes=_VMEM_LIMIT_BYTES,
        ),
        cost_estimate=cost,
    )(obs, wp_t, bp2d, wf_t, bf2d)


def init_linear_params(key, in_features, out_features):
    """Deterministic init matching nn.Linear's default scheme:
    U(-1/sqrt(in_features), 1/sqrt(in_features)) for both weight and bias."""
    k_w, k_b = jax.random.split(key)
    bound = 1.0 / jnp.sqrt(jnp.float32(in_features))
    weight = jax.random.uniform(
        k_w, (out_features, in_features), jnp.float32, minval=-bound, maxval=bound
    )
    bias = jax.random.uniform(
        k_b, (out_features,), jnp.float32, minval=-bound, maxval=bound
    )
    return weight, bias


if __name__ == "__main__":
    key = jax.random.PRNGKey(0)
    k_obs, k_pred, k_fixed = jax.random.split(key, 3)

    batch = 8
    input_dim = 32    # RND_model(input_dim=32)

    obs = jax.random.normal(k_obs, (batch, input_dim), jnp.float32)
    w_pred, b_pred = init_linear_params(k_pred, input_dim, OUT_DIM)
    w_fixed, b_fixed = init_linear_params(k_fixed, input_dim, OUT_DIM)

    # One-time param prep (outside the hot path).
    wp_t, bp2d = prepare_params(w_pred, b_pred)
    wf_t, bf2d = prepare_params(w_fixed, b_fixed)

    # --- forward(): prediction_NN(obs) ------------------------------------
    out = rnd_forward(obs, wp_t, bp2d)
    jax.block_until_ready(out)

    # Reference with the same bf16 operand rounding + f32 accumulation.
    obs32 = obs.astype(jnp.bfloat16).astype(jnp.float32)
    ref_pred = obs32 @ w_pred.astype(jnp.bfloat16).astype(jnp.float32).T + b_pred
    assert out.shape == (batch, OUT_DIM)
    assert jnp.allclose(out, ref_pred, atol=1e-3, rtol=1e-3), float(
        jnp.max(jnp.abs(out - ref_pred))
    )

    # --- fused intrinsic reward (the real RND use of this model) ----------
    rew = rnd_intrinsic_reward(obs, wp_t, bp2d, wf_t, bf2d)
    jax.block_until_ready(rew)

    ref_fixed = obs32 @ w_fixed.astype(jnp.bfloat16).astype(jnp.float32).T + b_fixed
    ref_rew = jnp.sum((ref_pred - ref_fixed) ** 2, axis=-1, keepdims=True)
    assert rew.shape == (batch, 1)
    assert jnp.allclose(rew, ref_rew, atol=1e-2, rtol=1e-3), float(
        jnp.max(jnp.abs(rew - ref_rew))
    )

    # TODO(synk): the Adam optimizer / requires_grad bookkeeping / check() host
    # conversion in the original module are host-side training plumbing with no
    # Pallas equivalent; only the forward compute is implemented here.
    print("KERNEL_OK")
</pallas_src>

<mosaic_0001>
module attributes {stable_mosaic.version = 11 : i64} {
  func.func @linear_kernel(%arg0: i32, %arg1: memref<8x32xf32, #tpu.memory_space<vmem>>, %arg2: memref<32x64xbf16, #tpu.memory_space<vmem>>, %arg3: memref<1x64xf32, #tpu.memory_space<vmem>>, %arg4: memref<8x64xf32, #tpu.memory_space<vmem>>) attributes {dimension_semantics = [#tpu.dimension_semantics<parallel>], iteration_bounds = array<i64: 1>, scalar_prefetch = 0 : i64, scratch_operands = 0 : i64, tpu.core_type = #tpu.core_type<tc>, window_params = [{transform_indices = @transform_0, window_bounds = array<i64: 8, 32>}, {pipeline_mode = #tpu.pipeline_mode<synchronous>, transform_indices = @transform_1, window_bounds = array<i64: 32, 64>}, {pipeline_mode = #tpu.pipeline_mode<synchronous>, transform_indices = @transform_2, window_bounds = array<i64: 1, 64>}, {transform_indices = @transform_3, window_bounds = array<i64: 8, 64>}]} {
    %c0 = arith.constant 0 : index
    %c0_0 = arith.constant 0 : index
    %0 = vector.load %arg1[%c0, %c0_0] : memref<8x32xf32, #tpu.memory_space<vmem>>, vector<8x32xf32>
    %1 = arith.truncf %0 : vector<8x32xf32> to vector<8x32xbf16>
    %c0_1 = arith.constant 0 : index
    %c0_2 = arith.constant 0 : index
    %2 = vector.load %arg2[%c0_1, %c0_2] : memref<32x64xbf16, #tpu.memory_space<vmem>>, vector<32x64xbf16>
    %cst = arith.constant dense<0.000000e+00> : vector<8x64xf32>
    %3 = tpu.matmul %1, %2, %cst {dimension_numbers = #tpu.dot_dimension_numbers<[1], [0], [0], [1], [0, 0, 1, 1], [], []>} : vector<8x32xbf16>, vector<32x64xbf16>, vector<8x64xf32> -> vector<8x64xf32>
    %c0_3 = arith.constant 0 : index
    %c0_4 = arith.constant 0 : index
    %4 = vector.load %arg3[%c0_3, %c0_4] : memref<1x64xf32, #tpu.memory_space<vmem>>, vector<1x64xf32>
    %5 = vector.broadcast %4 : vector<1x64xf32> to vector<8x64xf32>
    %6 = arith.addf %3, %5 : vector<8x64xf32>
    %c0_5 = arith.constant 0 : index
    %c0_6 = arith.constant 0 : index
    %7 = vector.load %arg4[%c0_5, %c0_6] : memref<8x64xf32, #tpu.memory_space<vmem>>, vector<8x64xf32>
    tpu.vector_store %arg4[%c0_5, %c0_6], %6 {strides = array<i32>} : memref<8x64xf32, #tpu.memory_space<vmem>>, vector<8x64xf32>,
    return
  }
  func.func @transform_0(%arg0: i32) -> (i32, i32) {
    %c0_i32 = arith.constant 0 : i32
    %c0_i32_0 = arith.constant 0 : i32
    return %arg0, %c0_i32 : i32, i32
  }
  func.func @transform_1(%arg0: i32) -> (i32, i32) {
    %c0_i32 = arith.constant 0 : i32
    %c0_i32_0 = arith.constant 0 : i32
    %c0_i32_1 = arith.constant 0 : i32
    return %c0_i32, %c0_i32_0 : i32, i32
  }
  func.func @transform_2(%arg0: i32) -> (i32, i32) {
    %c0_i32 = arith.constant 0 : i32
    %c0_i32_0 = arith.constant 0 : i32
    %c0_i32_1 = arith.constant 0 : i32
    return %c0_i32, %c0_i32_0 : i32, i32
  }
  func.func @transform_3(%arg0: i32) -> (i32, i32) {
    %c0_i32 = arith.constant 0 : i32
    %c0_i32_0 = arith.constant 0 : i32
    return %arg0, %c0_i32 : i32, i32
  }
}

</mosaic_0001>

<llo_original>
// kernel: rnd_forward.1
$region0: #{rnd_forward.1}
  #allocation0 [shape = 'u32[]', space=smem, size = 0x4, offset = 0x4, fixed_abs, tag = 'smem constant byte address 0x4 - core index']
  #allocation1 [shape = 'u32[72,128]{1,0:T(1,128)}', space=vmem, size = 0x9000, scoped, tag = 'internal scratch']
  %s0 = inlined_call_operand.hbm [shape: f32[8,32], index: 0, kind: input, shape index: {}]
  %s1 = inlined_call_operand.hbm [shape: bf16[32,64], index: 1, kind: input, shape index: {}]
  %s2 = inlined_call_operand.vmem [shape: f32[1,64], index: 2, kind: input, shape index: {}]
  %s3 = inlined_call_operand.hbm [shape: f32[8,64], index: 3, kind: output, shape index: {}]
  %s4 = sld [smem:[#allocation0]]
  $region30: #{rnd_forward.1} parent=0
    _
  %s6 = ssub.s32 1, %s4
  %s7 = scalar_select 0, %s6, %s4
  $region1: #{rnd_forward.1} parent=0
    #allocation2 [shape = 'u8[4096]{0}', space=vmem, size = 0x1000, scoped, tag = 'input window, operand 0, single buffered']
    #allocation3 [shape = 's32[1]{0}', space=sflag, size = 0x4, scoped, tag = 'scoped memory for rnd_forward.1']
    #allocation4 [shape = 's32[1]{0}', space=sflag, size = 0x4, scoped, tag = 'scoped memory for rnd_forward.1']
    #allocation5 [shape = 'u8[8192]{0}', space=vmem, size = 0x2000, scoped, tag = 'input window, operand 1, single buffered']
    #allocation6 [shape = 's32[1]{0}', space=sflag, size = 0x4, scoped, tag = 'scoped memory for rnd_forward.1']
    #allocation7 [shape = 'u8[4096]{0}', space=vmem, size = 0x1000, scoped, tag = 'output window, operand 0, single buffered']
    %8 = vsyncpa [#allocation3], 0
    %9 = vsyncpa [#allocation6], 0
    %10 = vsyncpa [#allocation4], 0
    // Predicated region
    $region2: #{rnd_forward.1} parent=1 // pred_check
      _
    $region3: #{rnd_forward.1} parent=1 // pred_check_branch
      %12 = sbr.rel (0) target = $region5
    $region4: #{rnd_forward.1} parent=1 // pred_region
      %14 = vsyncadd [#allocation3], 0
      %s16 = sshll.u32 %s0, 4
      %s17 = int_to_ptr.hbm [resolvable:$true] %s16
      %s18 = sshll.u32 [#allocation2], 4
      %s19 = int_to_ptr.vmem [resolvable:$true] %s18
      %21 = dma.hbm_to_vmem [thread:$0]  %s17, 128, %s19, [#allocation3]
    $region5: #{rnd_forward.1} parent=1 // pred_fallthru
      _
    // Predicated region
    $region6: #{rnd_forward.1} parent=1 // pred_check
      _
    $region7: #{rnd_forward.1} parent=1 // pred_check_branch
      %23 = sbr.rel (0) target = $region9
    $region8: #{rnd_forward.1} parent=1 // pred_region
      %25 = vsyncadd [#allocation6], 0
      %s26 = sshll.u32 %s1, 4
      %s27 = int_to_ptr.hbm [resolvable:$true] %s26
      %s28 = sshll.u32 [#allocation5], 4
      %s29 = int_to_ptr.vmem [resolvable:$true] %s28
      %34 = dma.hbm_to_vmem [thread:$0]  %s27, 256, %s29, [#allocation6], 64, 64, 4
    $region9: #{rnd_forward.1} parent=1 // pred_fallthru
      _
    // Predicated region
    $region10: #{rnd_forward.1} parent=1 // pred_check
      _
    $region11: #{rnd_forward.1} parent=1 // pred_check_branch
      %36 = sbr.rel (0) target = $region13
    $region12: #{rnd_forward.1} parent=1 // pred_region
      _
    $region13: #{rnd_forward.1} parent=1 // pred_fallthru
      _
    // Predicated region
    $region14: #{rnd_forward.1} parent=1 // pred_check
      _
    $region15: #{rnd_forward.1} parent=1 // pred_check_branch
      %38 = sbr.rel (0) target = $region17
    $region16: #{rnd_forward.1} parent=1 // pred_region
      %40 = dma.done [#allocation3], 128
    $region17: #{rnd_forward.1} parent=1 // pred_fallthru
      _
    // Predicated region
    $region18: #{rnd_forward.1} parent=1 // pred_check
      _
    $region19: #{rnd_forward.1} parent=1 // pred_check_branch
      %42 = sbr.rel (0) target = $region21
    $region20: #{rnd_forward.1} parent=1 // pred_region
      %44 = dma.done [#allocation6], 256
    $region21: #{rnd_forward.1} parent=1 // pred_fallthru
      _
    %v46 = vld [vmem:[#allocation2] sm:$0xff]
    %v47 = vpack.c.bf16 %v46, %v46
    %v48 = vld [vmem:[#allocation5] sm:$0xf]
    %v49 = vld [vmem:[#allocation5 + $0x4] sm:$0xf]
    %v50 = vld [vmem:[#allocation5 + $0x8] sm:$0xf]
    %v51 = vld [vmem:[#allocation5 + $0xc] sm:$0xf]
    %v52 = vld [vmem:[%s2] sm:$0x1]
    %v54 = vperm.slane %v52, 0
    %v60 = vunpack.c.l.b16 %v48
    %v61 = vunpack.c.l.b16 %v49
    %v62 = vunpack.c.l.b16 %v50
    %v63 = vunpack.c.l.b16 %v51
    %v64 = vpack.c.b16 %v61, %v60
    %v65 = vpack.c.b16 %v63, %v62
    %vm68 = vcmask 261120
    %v70 = vsel %vm68, %v47, 0
    %72 = vmatpush.bf16.msra.mxu0 0
    %73 = vmatpush.bf16.msra.mxu0 0
    %74 = vmatpush.bf16.msra.mxu0 0
    %75 = vmatpush.bf16.msra.mxu0 0
    %76 = vmatpush.bf16.msra.mxu0 0
    %77 = vmatpush.bf16.msra.mxu0 0
    %78 = vmatpush.bf16.msra.mxu0 %v65
    %79 = vmatpush.bf16.msra.mxu0 %v64
    %80 = vmatmul.bf16.gmra.mxu0 %v70
    %v81 = vpop.f32.mrf.mxu0
    %v82 = vadd.f32 %v54, %v81
    %v83 = vpop.f32.mrf.mxu0
    %84 = vdwg.mxu0
    %vm85 = vcmask 523264
    %86 = vst.msk [vmem:[#allocation7] sm:$0xff] %vm85, %v82
    // Predicated region
    $region22: #{rnd_forward.1} parent=1 // pred_check
      _
    $region23: #{rnd_forward.1} parent=1 // pred_check_branch
      %88 = sbr.rel (0) target = $region25
    $region24: #{rnd_forward.1} parent=1 // pred_region
      %90 = vsyncadd [#allocation4], 0
      %s92 = sshll.u32 [#allocation7], 4
      %s93 = int_to_ptr.vmem [resolvable:$true] %s92
      %s94 = sshll.u32 %s3, 4
      %s95 = int_to_ptr.hbm [resolvable:$true] %s94
      %97 = dma.vmem_to_hbm [thread:$0]  %s93, 128, %s95, [#allocation4]
    $region25: #{rnd_forward.1} parent=1 // pred_fallthru
      _
    // Predicated region
    $region26: #{rnd_forward.1} parent=1 // pred_check
      _
    $region27: #{rnd_forward.1} parent=1 // pred_check_branch
      %99 = sbr.rel (0) target = $region29
    $region28: #{rnd_forward.1} parent=1 // pred_region
      %101 = dma.done [#allocation4], 128
    $region29: #{rnd_forward.1} parent=1 // pred_fallthru
      _
    %102 = vsyncpa [#allocation3], 1
    %103 = vsyncpa [#allocation6], 1
    %104 = vsyncpa [#allocation4], 1

</llo_original>
